<compile_context>
chip_gen: v6e
topology: v6e:2x2x1
jax: 0.10.0
libtpu: 0.0.40
codegen_flags: <defaults>
</compile_context>

<pallas_src>
import numpy as np
import jax
import jax.numpy as jnp
from jax.experimental import pallas as pl
from jax.experimental.pallas import tpu as pltpu


# ----------------------------- plain-JAX glue ------------------------------

def layernorm2d(x, weight, bias, eps=1e-5):
    """LayerNorm2D: per-sample mean / unbiased std over (C, H, W), like torch."""
    mean = jnp.mean(x, axis=(1, 2, 3), keepdims=True)
    n = x.shape[1] * x.shape[2] * x.shape[3]
    var = jnp.sum((x - mean) ** 2, axis=(1, 2, 3), keepdims=True) / (n - 1)
    std = jnp.sqrt(var)
    xn = (x - mean) / (std + eps)
    return weight[None, :, None, None] * xn + bias[None, :, None, None]


# ------------------------------ Pallas kernel -------------------------------

def _make_mhcv_kernel(dim, head_num, head_size, max_disparity):
    D = max_disparity

    def kernel(ln_ref, rn_ref, lraw_ref, w_ref, b_ref, out_ref, copy_sem):
        # VMEM blocks:
        #   ln_ref / rn_ref / lraw_ref : (1, dim, TH, W)
        #   out_ref                    : (1, dim + D, TH, W)
        # SMEM scalars:
        #   w_ref : (D * head_num,) flattened grouped 1x1-conv weights
        #   b_ref : (D,)            grouped-conv bias

        # Fused torch.cat((left_image, cost_volume), 1): copy the raw left
        # channels into the first `dim` output channels with the DMA engine so
        # the copy does not occupy vld/vst compute slots.
        passthru = pltpu.make_async_copy(lraw_ref, out_ref.at[:, :dim], copy_sem)
        passthru.start()

        # Disparity loop fully unrolled (small static D).  Each (d, g) step
        # reads its per-head slab straight from the refs, rolls the right slab
        # along W (XLU), multiply-reduces over head_size (VALU) and combines
        # heads with the SMEM conv weights.  No scratch write-back, no
        # loop-carried dependency -> live ranges bounded per step.
        for d in range(D):
            plane = None
            for g in range(head_num):
                lo = g * head_size
                lh = ln_ref[0, lo:lo + head_size]                    # (hs, TH, W)
                rh = pltpu.roll(rn_ref[0, lo:lo + head_size],
                                shift=d + 1, axis=2)                 # roll along W
                cost_g = jnp.sum(lh * rh, axis=0)                    # (TH, W)
                term = w_ref[d * head_num + g] * cost_g
                plane = term if plane is None else plane + term
            out_ref[0, dim + d, :, :] = plane + b_ref[d]

        passthru.wait()

    return kernel


def _vmem_budget_bytes(frac=0.6, fallback_capacity=64 << 20):
    """Generation-aware VMEM budget (64 MiB v7x, 128 MiB v5e/v6e)."""
    try:
        capacity = int(pltpu.get_tpu_info().vmem_capacity_bytes)
    except Exception:
        capacity = fallback_capacity          # conservative: fits every generation
    return int(capacity * frac)


def _choose_tile_h(B, H, dim, W, max_disparity, budget_bytes, min_programs=4):
    """Largest TH (multiple of 8, dividing H) whose double-buffered working set
    fits the VMEM budget, while keeping >= min_programs total grid programs so
    the ('parallel','parallel') grid load-balances across v7x's two cores."""
    # Per H-row VMEM bytes: 3 double-buffered f32 input streams + the
    # double-buffered fused f32 output block.
    bytes_per_row = (3 * dim + (dim + max_disparity)) * W * 4 * 2
    if H % 8 != 0:
        if H * bytes_per_row > budget_bytes:
            # TODO(synk): add an 'arbitrary' channel-group grid axis with
            # pl.when init/finalize accumulation for very large dim*W.
            raise ValueError("full-H block exceeds the VMEM budget; "
                             "channel tiling needed")
        return H
    candidates = [t for t in range(8, H + 1, 8) if H % t == 0]
    fitting = [t for t in candidates if t * bytes_per_row <= budget_bytes]
    if not fitting:
        raise ValueError("even TH=8 exceeds the VMEM budget; "
                         "channel tiling needed")
    balanced = [t for t in fitting if B * (H // t) >= min_programs]
    return max(balanced) if balanced else max(fitting)


def mhcv_cost_volume_fused(left_norm, right_norm, left_raw, conv_w_flat, conv_b,
                           max_disparity, head_size, tile_h=None):
    B, dim, H, W = left_norm.shape
    assert dim % head_size == 0, "dim must be divisible by head_size"
    head_num = dim // head_size
    D = max_disparity

    budget = _vmem_budget_bytes()
    TH = _choose_tile_h(B, H, dim, W, D, budget) if tile_h is None else tile_h
    assert H % TH == 0 and (TH % 8 == 0 or TH == H), "bad H tile"

    kernel = _make_mhcv_kernel(dim, head_num, head_size, D)
    feat_spec = pl.BlockSpec((1, dim, TH, W), lambda b, h: (b, 0, h, 0))

    return pl.pallas_call(
        kernel,
        out_shape=jax.ShapeDtypeStruct((B, dim + D, H, W), jnp.float32),
        grid=(B, H // TH),
        in_specs=[
            feat_spec,                                           # normalized left
            feat_spec,                                           # normalized right
            feat_spec,                                           # raw left (passthrough)
            pl.BlockSpec(memory_space=pltpu.MemorySpace.SMEM),   # flat conv weights
            pl.BlockSpec(memory_space=pltpu.MemorySpace.SMEM),   # conv bias
        ],
        out_specs=pl.BlockSpec((1, dim + D, TH, W), lambda b, h: (b, 0, h, 0)),
        scratch_shapes=[pltpu.SemaphoreType.DMA(())],
        compiler_params=pltpu.CompilerParams(
            dimension_semantics=("parallel", "parallel"),
            vmem_limit_bytes=budget),
    )(left_norm, right_norm, left_raw, conv_w_flat, conv_b)


# --------------------------- full forward pass ------------------------------

def mhcv_forward(left_image, right_image, params, max_disparity, head_size,
                 tile_h=None):
    ln_w, ln_b, conv_w, conv_b = params
    left = layernorm2d(left_image, ln_w, ln_b)
    right = layernorm2d(right_image, ln_w, ln_b)
    # Flatten the tiny grouped 1x1-conv weight to 1-D for SMEM (2-D SMEM pads
    # the lane dim to 128 words; 1-D stays ~D*head_num words).
    w_flat = conv_w[:, :, 0, 0].reshape(-1)
    return mhcv_cost_volume_fused(left, right, left_image, w_flat, conv_b,
                                  max_disparity, head_size, tile_h=tile_h)


def mhcv_reference(left_image, right_image, params, max_disparity, head_size):
    """Pure-JAX reference following the PyTorch forward literally."""
    B, dim, H, W = left_image.shape
    head_num = dim // head_size
    ln_w, ln_b, conv_w, conv_b = params
    left = layernorm2d(left_image, ln_w, ln_b)
    right = layernorm2d(right_image, ln_w, ln_b)
    left_r = left.reshape(B, head_num, head_size, H, W)
    costs = []
    for d in range(max_disparity):
        rs = jnp.roll(right, d + 1, axis=3).reshape(B, head_num, head_size, H, W)
        costs.append(jnp.sum(left_r * rs, axis=2))           # (B, head_num, H, W)
    cv = jnp.concatenate(costs, axis=1).reshape(B, max_disparity, head_num, H, W)
    out = jnp.einsum("bdghw,dg->bdhw", cv, conv_w[:, :, 0, 0]) \
        + conv_b[None, :, None, None]
    return jnp.concatenate([left_image, out], axis=1)


# ----------------------------------- main -----------------------------------

if __name__ == "__main__":
    # Small but TPU-friendly shapes: W = 128 keeps the lane dimension dense;
    # H = 16 lets the tile chooser pick TH = 8 (grid = (2, 2) = 4 programs).
    B, dim, H, W = 2, 16, 16, 128
    head_size = 8
    head_num = dim // head_size
    max_disparity = 4

    key = jax.random.PRNGKey(0)
    k1, k2, k3, k4 = jax.random.split(key, 4)
    left_image = jax.random.normal(k1, (B, dim, H, W), jnp.float32)
    right_image = jax.random.normal(k2, (B, dim, H, W), jnp.float32)

    # Parameters (shapes from MultiHeadCostVolume.__init__)
    ln_w = jnp.ones((dim,), jnp.float32)                     # LayerNorm2D.weight
    ln_b = jnp.zeros((dim,), jnp.float32)                    # LayerNorm2D.bias
    conv_w = 0.1 * jax.random.normal(k3, (max_disparity, head_num, 1, 1),
                                     jnp.float32)
    conv_b = 0.1 * jax.random.normal(k4, (max_disparity,), jnp.float32)
    params = (ln_w, ln_b, conv_w, conv_b)

    out = mhcv_forward(left_image, right_image, params, max_disparity, head_size)
    out = jax.block_until_ready(out)

    ref = mhcv_reference(left_image, right_image, params, max_disparity,
                         head_size)
    assert out.shape == (B, dim + max_disparity, H, W)
    np.testing.assert_allclose(np.asarray(out), np.asarray(ref),
                               rtol=1e-4, atol=1e-4)
    print("KERNEL_OK")
</pallas_src>

<mosaic_0001>
module attributes {stable_mosaic.version = 11 : i64} {
  func.func @kernel(%arg0: i32, %arg1: i32, %arg2: memref<1x16x8x128xf32, #tpu.memory_space<vmem>>, %arg3: memref<1x16x8x128xf32, #tpu.memory_space<vmem>>, %arg4: memref<1x16x8x128xf32, #tpu.memory_space<vmem>>, %arg5: memref<8xf32, #tpu.memory_space<smem>>, %arg6: memref<4xf32, #tpu.memory_space<smem>>, %arg7: memref<1x20x8x128xf32, #tpu.memory_space<vmem>>, %arg8: memref<!tpu.dma_semaphore, #tpu.memory_space<semaphore_mem>>) attributes {dimension_semantics = [#tpu.dimension_semantics<parallel>, #tpu.dimension_semantics<parallel>], iteration_bounds = array<i64: 2, 2>, scalar_prefetch = 0 : i64, scratch_operands = 1 : i64, tpu.core_type = #tpu.core_type<tc>, window_params = [{transform_indices = @transform_0, window_bounds = array<i64: 1, 16, 8, 128>}, {transform_indices = @transform_1, window_bounds = array<i64: 1, 16, 8, 128>}, {transform_indices = @transform_2, window_bounds = array<i64: 1, 16, 8, 128>}, {transform_indices = @transform_3, window_bounds = array<i64: 8>}, {transform_indices = @transform_4, window_bounds = array<i64: 4>}, {transform_indices = @transform_5, window_bounds = array<i64: 1, 20, 8, 128>}]} {
    %c0_i32 = arith.constant 0 : i32
    %c0_i32_0 = arith.constant 0 : i32
    %c0_i32_1 = arith.constant 0 : i32
    %c0_i32_2 = arith.constant 0 : i32
    %0 = tpu.memref_slice %arg7[%c0_i32, %c0_i32_0, %c0_i32_1, %c0_i32_2] : memref<1x20x8x128xf32, #tpu.memory_space<vmem>> -> memref<1x16x8x128xf32, #tpu.memory_space<vmem>>
    tpu.enqueue_dma source(%arg4 : memref<1x16x8x128xf32, #tpu.memory_space<vmem>>) target(%0 : memref<1x16x8x128xf32, #tpu.memory_space<vmem>>) target_semaphore(%arg8 : memref<!tpu.dma_semaphore, #tpu.memory_space<semaphore_mem>>)
    %c0 = arith.constant 0 : index
    %c0_3 = arith.constant 0 : index
    %c0_4 = arith.constant 0 : index
    %c0_5 = arith.constant 0 : index
    %1 = vector.load %arg2[%c0, %c0_3, %c0_4, %c0_5] : memref<1x16x8x128xf32, #tpu.memory_space<vmem>>, vector<1x8x8x128xf32>
    %2 = vector.shape_cast %1 : vector<1x8x8x128xf32> to vector<8x8x128xf32>
    %c0_6 = arith.constant 0 : index
    %c0_7 = arith.constant 0 : index
    %c0_8 = arith.constant 0 : index
    %c0_9 = arith.constant 0 : index
    %3 = vector.load %arg3[%c0_6, %c0_7, %c0_8, %c0_9] : memref<1x16x8x128xf32, #tpu.memory_space<vmem>>, vector<1x8x8x128xf32>
    %4 = vector.shape_cast %3 : vector<1x8x8x128xf32> to vector<8x8x128xf32>
    %c1_i32 = arith.constant 1 : i32
    %5 = tpu.dynamic_rotate %4 by %c1_i32 dim 2 : vector<8x8x128xf32>, i32 -> vector<8x8x128xf32>
    %6 = arith.mulf %2, %5 : vector<8x8x128xf32>
    %cst = arith.constant dense<0.000000e+00> : vector<8x128xf32>
    %7 = vector.multi_reduction <add>, %6, %cst [0] : vector<8x8x128xf32> to vector<8x128xf32>
    %c0_10 = arith.constant 0 : index
    %8 = memref.load %arg5[%c0_10] : memref<8xf32, #tpu.memory_space<smem>>
    %9 = vector.broadcast %8 : f32 to vector<8x128xf32>
    %10 = arith.mulf %9, %7 : vector<8x128xf32>
    %c0_11 = arith.constant 0 : index
    %c8 = arith.constant 8 : index
    %c0_12 = arith.constant 0 : index
    %c0_13 = arith.constant 0 : index
    %11 = vector.load %arg2[%c0_11, %c8, %c0_12, %c0_13] : memref<1x16x8x128xf32, #tpu.memory_space<vmem>>, vector<1x8x8x128xf32>
    %12 = vector.shape_cast %11 : vector<1x8x8x128xf32> to vector<8x8x128xf32>
    %c0_14 = arith.constant 0 : index
    %c8_15 = arith.constant 8 : index
    %c0_16 = arith.constant 0 : index
    %c0_17 = arith.constant 0 : index
    %13 = vector.load %arg3[%c0_14, %c8_15, %c0_16, %c0_17] : memref<1x16x8x128xf32, #tpu.memory_space<vmem>>, vector<1x8x8x128xf32>
    %14 = vector.shape_cast %13 : vector<1x8x8x128xf32> to vector<8x8x128xf32>
    %c1_i32_18 = arith.constant 1 : i32
    %15 = tpu.dynamic_rotate %14 by %c1_i32_18 dim 2 : vector<8x8x128xf32>, i32 -> vector<8x8x128xf32>
    %16 = arith.mulf %12, %15 : vector<8x8x128xf32>
    %cst_19 = arith.constant dense<0.000000e+00> : vector<8x128xf32>
    %17 = vector.multi_reduction <add>, %16, %cst_19 [0] : vector<8x8x128xf32> to vector<8x128xf32>
    %c1 = arith.constant 1 : index
    %18 = memref.load %arg5[%c1] : memref<8xf32, #tpu.memory_space<smem>>
    %19 = vector.broadcast %18 : f32 to vector<8x128xf32>
    %20 = arith.mulf %19, %17 : vector<8x128xf32>
    %21 = arith.addf %10, %20 : vector<8x128xf32>
    %c0_20 = arith.constant 0 : index
    %22 = memref.load %arg6[%c0_20] : memref<4xf32, #tpu.memory_space<smem>>
    %23 = vector.broadcast %22 : f32 to vector<8x128xf32>
    %24 = arith.addf %21, %23 : vector<8x128xf32>
    %c0_21 = arith.constant 0 : index
    %c16 = arith.constant 16 : index
    %c0_22 = arith.constant 0 : index
    %c0_23 = arith.constant 0 : index
    %25 = vector.load %arg7[%c0_21, %c16, %c0_22, %c0_23] : memref<1x20x8x128xf32, #tpu.memory_space<vmem>>, vector<1x1x8x128xf32>
    %26 = vector.shape_cast %25 : vector<1x1x8x128xf32> to vector<8x128xf32>
    %27 = vector.shape_cast %24 : vector<8x128xf32> to vector<1x1x8x128xf32>
    tpu.vector_store %arg7[%c0_21, %c16, %c0_22, %c0_23], %27 {strides = array<i32>} : memref<1x20x8x128xf32, #tpu.memory_space<vmem>>, vector<1x1x8x128xf32>,
    %c0_24 = arith.constant 0 : index
    %c0_25 = arith.constant 0 : index
    %c0_26 = arith.constant 0 : index
    %c0_27 = arith.constant 0 : index
    %28 = vector.load %arg2[%c0_24, %c0_25, %c0_26, %c0_27] : memref<1x16x8x128xf32, #tpu.memory_space<vmem>>, vector<1x8x8x128xf32>
    %29 = vector.shape_cast %28 : vector<1x8x8x128xf32> to vector<8x8x128xf32>
    %c0_28 = arith.constant 0 : index
    %c0_29 = arith.constant 0 : index
    %c0_30 = arith.constant 0 : index
    %c0_31 = arith.constant 0 : index
    %30 = vector.load %arg3[%c0_28, %c0_29, %c0_30, %c0_31] : memref<1x16x8x128xf32, #tpu.memory_space<vmem>>, vector<1x8x8x128xf32>
    %31 = vector.shape_cast %30 : vector<1x8x8x128xf32> to vector<8x8x128xf32>
    %c2_i32 = arith.constant 2 : i32
    %32 = tpu.dynamic_rotate %31 by %c2_i32 dim 2 : vector<8x8x128xf32>, i32 -> vector<8x8x128xf32>
    %33 = arith.mulf %29, %32 : vector<8x8x128xf32>
    %cst_32 = arith.constant dense<0.000000e+00> : vector<8x128xf32>
    %34 = vector.multi_reduction <add>, %33, %cst_32 [0] : vector<8x8x128xf32> to vector<8x128xf32>
    %c2 = arith.constant 2 : index
    %35 = memref.load %arg5[%c2] : memref<8xf32, #tpu.memory_space<smem>>
    %36 = vector.broadcast %35 : f32 to vector<8x128xf32>
    %37 = arith.mulf %36, %34 : vector<8x128xf32>
    %c0_33 = arith.constant 0 : index
    %c8_34 = arith.constant 8 : index
    %c0_35 = arith.constant 0 : index
    %c0_36 = arith.constant 0 : index
    %38 = vector.load %arg2[%c0_33, %c8_34, %c0_35, %c0_36] : memref<1x16x8x128xf32, #tpu.memory_space<vmem>>, vector<1x8x8x128xf32>
    %39 = vector.shape_cast %38 : vector<1x8x8x128xf32> to vector<8x8x128xf32>
    %c0_37 = arith.constant 0 : index
    %c8_38 = arith.constant 8 : index
    %c0_39 = arith.constant 0 : index
    %c0_40 = arith.constant 0 : index
    %40 = vector.load %arg3[%c0_37, %c8_38, %c0_39, %c0_40] : memref<1x16x8x128xf32, #tpu.memory_space<vmem>>, vector<1x8x8x128xf32>
    %41 = vector.shape_cast %40 : vector<1x8x8x128xf32> to vector<8x8x128xf32>
    %c2_i32_41 = arith.constant 2 : i32
    %42 = tpu.dynamic_rotate %41 by %c2_i32_41 dim 2 : vector<8x8x128xf32>, i32 -> vector<8x8x128xf32>
    %43 = arith.mulf %39, %42 : vector<8x8x128xf32>
    %cst_42 = arith.constant dense<0.000000e+00> : vector<8x128xf32>
    %44 = vector.multi_reduction <add>, %43, %cst_42 [0] : vector<8x8x128xf32> to vector<8x128xf32>
    %c3 = arith.constant 3 : index
    %45 = memref.load %arg5[%c3] : memref<8xf32, #tpu.memory_space<smem>>
    %46 = vector.broadcast %45 : f32 to vector<8x128xf32>
    %47 = arith.mulf %46, %44 : vector<8x128xf32>
    %48 = arith.addf %37, %47 : vector<8x128xf32>
    %c1_43 = arith.constant 1 : index
    %49 = memref.load %arg6[%c1_43] : memref<4xf32, #tpu.memory_space<smem>>
    %50 = vector.broadcast %49 : f32 to vector<8x128xf32>
    %51 = arith.addf %48, %50 : vector<8x128xf32>
    %c0_44 = arith.constant 0 : index
    %c17 = arith.constant 17 : index
    %c0_45 = arith.constant 0 : index
    %c0_46 = arith.constant 0 : index
    %52 = vector.load %arg7[%c0_44, %c17, %c0_45, %c0_46] : memref<1x20x8x128xf32, #tpu.memory_space<vmem>>, vector<1x1x8x128xf32>
    %53 = vector.shape_cast %52 : vector<1x1x8x128xf32> to vector<8x128xf32>
    %54 = vector.shape_cast %51 : vector<8x128xf32> to vector<1x1x8x128xf32>
    tpu.vector_store %arg7[%c0_44, %c17, %c0_45, %c0_46], %54 {strides = array<i32>} : memref<1x20x8x128xf32, #tpu.memory_space<vmem>>, vector<1x1x8x128xf32>,
    %c0_47 = arith.constant 0 : index
    %c0_48 = arith.constant 0 : index
    %c0_49 = arith.constant 0 : index
    %c0_50 = arith.constant 0 : index
    %55 = vector.load %arg2[%c0_47, %c0_48, %c0_49, %c0_50] : memref<1x16x8x128xf32, #tpu.memory_space<vmem>>, vector<1x8x8x128xf32>
    %56 = vector.shape_cast %55 : vector<1x8x8x128xf32> to vector<8x8x128xf32>
    %c0_51 = arith.constant 0 : index
    %c0_52 = arith.constant 0 : index
    %c0_53 = arith.constant 0 : index
    %c0_54 = arith.constant 0 : index
    %57 = vector.load %arg3[%c0_51, %c0_52, %c0_53, %c0_54] : memref<1x16x8x128xf32, #tpu.memory_space<vmem>>, vector<1x8x8x128xf32>
    %58 = vector.shape_cast %57 : vector<1x8x8x128xf32> to vector<8x8x128xf32>
    %c3_i32 = arith.constant 3 : i32
    %59 = tpu.dynamic_rotate %58 by %c3_i32 dim 2 : vector<8x8x128xf32>, i32 -> vector<8x8x128xf32>
    %60 = arith.mulf %56, %59 : vector<8x8x128xf32>
    %cst_55 = arith.constant dense<0.000000e+00> : vector<8x128xf32>
    %61 = vector.multi_reduction <add>, %60, %cst_55 [0] : vector<8x8x128xf32> to vector<8x128xf32>
    %c4 = arith.constant 4 : index
    %62 = memref.load %arg5[%c4] : memref<8xf32, #tpu.memory_space<smem>>
    %63 = vector.broadcast %62 : f32 to vector<8x128xf32>
    %64 = arith.mulf %63, %61 : vector<8x128xf32>
    %c0_56 = arith.constant 0 : index
    %c8_57 = arith.constant 8 : index
    %c0_58 = arith.constant 0 : index
    %c0_59 = arith.constant 0 : index
    %65 = vector.load %arg2[%c0_56, %c8_57, %c0_58, %c0_59] : memref<1x16x8x128xf32, #tpu.memory_space<vmem>>, vector<1x8x8x128xf32>
    %66 = vector.shape_cast %65 : vector<1x8x8x128xf32> to vector<8x8x128xf32>
    %c0_60 = arith.constant 0 : index
    %c8_61 = arith.constant 8 : index
    %c0_62 = arith.constant 0 : index
    %c0_63 = arith.constant 0 : index
    %67 = vector.load %arg3[%c0_60, %c8_61, %c0_62, %c0_63] : memref<1x16x8x128xf32, #tpu.memory_space<vmem>>, vector<1x8x8x128xf32>
    %68 = vector.shape_cast %67 : vector<1x8x8x128xf32> to vector<8x8x128xf32>
    %c3_i32_64 = arith.constant 3 : i32
    %69 = tpu.dynamic_rotate %68 by %c3_i32_64 dim 2 : vector<8x8x128xf32>, i32 -> vector<8x8x128xf32>
    %70 = arith.mulf %66, %69 : vector<8x8x128xf32>
    %cst_65 = arith.constant dense<0.000000e+00> : vector<8x128xf32>
    %71 = vector.multi_reduction <add>, %70, %cst_65 [0] : vector<8x8x128xf32> to vector<8x128xf32>
    %c5 = arith.constant 5 : index
    %72 = memref.load %arg5[%c5] : memref<8xf32, #tpu.memory_space<smem>>
    %73 = vector.broadcast %72 : f32 to vector<8x128xf32>
    %74 = arith.mulf %73, %71 : vector<8x128xf32>
    %75 = arith.addf %64, %74 : vector<8x128xf32>
    %c2_66 = arith.constant 2 : index
    %76 = memref.load %arg6[%c2_66] : memref<4xf32, #tpu.memory_space<smem>>
    %77 = vector.broadcast %76 : f32 to vector<8x128xf32>
    %78 = arith.addf %75, %77 : vector<8x128xf32>
    %c0_67 = arith.constant 0 : index
    %c18 = arith.constant 18 : index
    %c0_68 = arith.constant 0 : index
    %c0_69 = arith.constant 0 : index
    %79 = vector.load %arg7[%c0_67, %c18, %c0_68, %c0_69] : memref<1x20x8x128xf32, #tpu.memory_space<vmem>>, vector<1x1x8x128xf32>
    %80 = vector.shape_cast %79 : vector<1x1x8x128xf32> to vector<8x128xf32>
    %81 = vector.shape_cast %78 : vector<8x128xf32> to vector<1x1x8x128xf32>
    tpu.vector_store %arg7[%c0_67, %c18, %c0_68, %c0_69], %81 {strides = array<i32>} : memref<1x20x8x128xf32, #tpu.memory_space<vmem>>, vector<1x1x8x128xf32>,
    %c0_70 = arith.constant 0 : index
    %c0_71 = arith.constant 0 : index
    %c0_72 = arith.constant 0 : index
    %c0_73 = arith.constant 0 : index
    %82 = vector.load %arg2[%c0_70, %c0_71, %c0_72, %c0_73] : memref<1x16x8x128xf32, #tpu.memory_space<vmem>>, vector<1x8x8x128xf32>
    %83 = vector.shape_cast %82 : vector<1x8x8x128xf32> to vector<8x8x128xf32>
    %c0_74 = arith.constant 0 : index
    %c0_75 = arith.constant 0 : index
    %c0_76 = arith.constant 0 : index
    %c0_77 = arith.constant 0 : index
    %84 = vector.load %arg3[%c0_74, %c0_75, %c0_76, %c0_77] : memref<1x16x8x128xf32, #tpu.memory_space<vmem>>, vector<1x8x8x128xf32>
    %85 = vector.shape_cast %84 : vector<1x8x8x128xf32> to vector<8x8x128xf32>
    %c4_i32 = arith.constant 4 : i32
    %86 = tpu.dynamic_rotate %85 by %c4_i32 dim 2 : vector<8x8x128xf32>, i32 -> vector<8x8x128xf32>
    %87 = arith.mulf %83, %86 : vector<8x8x128xf32>
    %cst_78 = arith.constant dense<0.000000e+00> : vector<8x128xf32>
    %88 = vector.multi_reduction <add>, %87, %cst_78 [0] : vector<8x8x128xf32> to vector<8x128xf32>
    %c6 = arith.constant 6 : index
    %89 = memref.load %arg5[%c6] : memref<8xf32, #tpu.memory_space<smem>>
    %90 = vector.broadcast %89 : f32 to vector<8x128xf32>
    %91 = arith.mulf %90, %88 : vector<8x128xf32>
    %c0_79 = arith.constant 0 : index
    %c8_80 = arith.constant 8 : index
    %c0_81 = arith.constant 0 : index
    %c0_82 = arith.constant 0 : index
    %92 = vector.load %arg2[%c0_79, %c8_80, %c0_81, %c0_82] : memref<1x16x8x128xf32, #tpu.memory_space<vmem>>, vector<1x8x8x128xf32>
    %93 = vector.shape_cast %92 : vector<1x8x8x128xf32> to vector<8x8x128xf32>
    %c0_83 = arith.constant 0 : index
    %c8_84 = arith.constant 8 : index
    %c0_85 = arith.constant 0 : index
    %c0_86 = arith.constant 0 : index
    %94 = vector.load %arg3[%c0_83, %c8_84, %c0_85, %c0_86] : memref<1x16x8x128xf32, #tpu.memory_space<vmem>>, vector<1x8x8x128xf32>
    %95 = vector.shape_cast %94 : vector<1x8x8x128xf32> to vector<8x8x128xf32>
    %c4_i32_87 = arith.constant 4 : i32
    %96 = tpu.dynamic_rotate %95 by %c4_i32_87 dim 2 : vector<8x8x128xf32>, i32 -> vector<8x8x128xf32>
    %97 = arith.mulf %93, %96 : vector<8x8x128xf32>
    %cst_88 = arith.constant dense<0.000000e+00> : vector<8x128xf32>
    %98 = vector.multi_reduction <add>, %97, %cst_88 [0] : vector<8x8x128xf32> to vector<8x128xf32>
    %c7 = arith.constant 7 : index
    %99 = memref.load %arg5[%c7] : memref<8xf32, #tpu.memory_space<smem>>
    %100 = vector.broadcast %99 : f32 to vector<8x128xf32>
    %101 = arith.mulf %100, %98 : vector<8x128xf32>
    %102 = arith.addf %91, %101 : vector<8x128xf32>
    %c3_89 = arith.constant 3 : index
    %103 = memref.load %arg6[%c3_89] : memref<4xf32, #tpu.memory_space<smem>>
    %104 = vector.broadcast %103 : f32 to vector<8x128xf32>
    %105 = arith.addf %102, %104 : vector<8x128xf32>
    %c0_90 = arith.constant 0 : index
    %c19 = arith.constant 19 : index
    %c0_91 = arith.constant 0 : index
    %c0_92 = arith.constant 0 : index
    %106 = vector.load %arg7[%c0_90, %c19, %c0_91, %c0_92] : memref<1x20x8x128xf32, #tpu.memory_space<vmem>>, vector<1x1x8x128xf32>
    %107 = vector.shape_cast %106 : vector<1x1x8x128xf32> to vector<8x128xf32>
    %108 = vector.shape_cast %105 : vector<8x128xf32> to vector<1x1x8x128xf32>
    tpu.vector_store %arg7[%c0_90, %c19, %c0_91, %c0_92], %108 {strides = array<i32>} : memref<1x20x8x128xf32, #tpu.memory_space<vmem>>, vector<1x1x8x128xf32>,
    %c0_i32_93 = arith.constant 0 : i32
    %c0_i32_94 = arith.constant 0 : i32
    %c0_i32_95 = arith.constant 0 : i32
    %c0_i32_96 = arith.constant 0 : i32
    %109 = tpu.memref_slice %arg7[%c0_i32_93, %c0_i32_94, %c0_i32_95, %c0_i32_96] : memref<1x20x8x128xf32, #tpu.memory_space<vmem>> -> memref<1x16x8x128xf32, #tpu.memory_space<vmem>>
    tpu.wait_dma2 semaphore(%arg8 : memref<!tpu.dma_semaphore, #tpu.memory_space<semaphore_mem>>) src(%arg4 : memref<1x16x8x128xf32, #tpu.memory_space<vmem>>) dst(%109 : memref<1x16x8x128xf32, #tpu.memory_space<vmem>>)
    return
  }
  func.func @transform_0(%arg0: i32, %arg1: i32) -> (i32, i32, i32, i32) {
    %c0_i32 = arith.constant 0 : i32
    %c0_i32_0 = arith.constant 0 : i32
    %c0_i32_1 = arith.constant 0 : i32
    return %arg0, %c0_i32, %arg1, %c0_i32_0 : i32, i32, i32, i32
  }
  func.func @transform_1(%arg0: i32, %arg1: i32) -> (i32, i32, i32, i32) {
    %c0_i32 = arith.constant 0 : i32
    %c0_i32_0 = arith.constant 0 : i32
    %c0_i32_1 = arith.constant 0 : i32
    return %arg0, %c0_i32, %arg1, %c0_i32_0 : i32, i32, i32, i32
  }
  func.func @transform_2(%arg0: i32, %arg1: i32) -> (i32, i32, i32, i32) {
    %c0_i32 = arith.constant 0 : i32
    %c0_i32_0 = arith.constant 0 : i32
    %c0_i32_1 = arith.constant 0 : i32
    return %arg0, %c0_i32, %arg1, %c0_i32_0 : i32, i32, i32, i32
  }
  func.func @transform_3(%arg0: i32, %arg1: i32) -> i32 {
    %c0_i32 = arith.constant 0 : i32
    %c0_i32_0 = arith.constant 0 : i32
    return %c0_i32 : i32
  }
  func.func @transform_4(%arg0: i32, %arg1: i32) -> i32 {
    %c0_i32 = arith.constant 0 : i32
    %c0_i32_0 = arith.constant 0 : i32
    return %c0_i32 : i32
  }
  func.func @transform_5(%arg0: i32, %arg1: i32) -> (i32, i32, i32, i32) {
    %c0_i32 = arith.constant 0 : i32
    %c0_i32_0 = arith.constant 0 : i32
    %c0_i32_1 = arith.constant 0 : i32
    return %arg0, %c0_i32, %arg1, %c0_i32_0 : i32, i32, i32, i32
  }
}

</mosaic_0001>

<llo_original>
// kernel: tpu_custom_call.1
$region0: #{tpu_custom_call.1}
  #allocation0 [shape = 'u32[]', space=smem, size = 0x4, offset = 0x4, fixed_abs, tag = 'smem constant byte address 0x4 - core index']
  #allocation1 [shape = 'u32[144,128]{1,0:T(1,128)}', space=vmem, size = 0x12000, scoped, tag = 'internal scratch']
  #allocation2 [shape = 's32[1]{0}', space=sflag, size = 0x4, scoped, tag = 'scratch operand']
  #allocation14 [shape = 's32[]', space=sflag, size = 0x4, offset = 0, fixed_abs, tag = 'sflag constant byte address 0x0 - dummy sync flag']
  %s0 = inlined_call_operand.hbm [shape: f32[2,16,16,128], index: 0, kind: input, shape index: {}]
  %s1 = inlined_call_operand.hbm [shape: f32[2,16,16,128], index: 1, kind: input, shape index: {}]
  %s2 = inlined_call_operand.hbm [shape: f32[2,16,16,128], index: 2, kind: input, shape index: {}]
  %s3 = inlined_call_operand.vmem [shape: f32[8], index: 3, kind: input, shape index: {}]
  %s4 = inlined_call_operand.vmem [shape: f32[4], index: 4, kind: input, shape index: {}]
  %s5 = inlined_call_operand.hbm [shape: f32[2,20,16,128], index: 5, kind: output, shape index: {}]
  %s6 = sld [smem:[#allocation0]]
  $region107: #{tpu_custom_call.1} parent=0
    _
  %s8 = ssub.s32 1, %s6
  %s9 = scalar_select 0, %s8, %s6
  $region1: #{tpu_custom_call.1} parent=0
    #allocation3 [shape = 'u8[131072]{0}', space=vmem, size = 0x20000, scoped, tag = 'input window, operand 0']
    #allocation4 [shape = 's32[2]{0}', space=sflag, size = 0x8, scoped, tag = 'scoped memory for tpu_custom_call.1']
    #allocation5 [shape = 's32[2]{0}', space=sflag, size = 0x8, scoped, tag = 'scoped memory for tpu_custom_call.1']
    #allocation6 [shape = 's32[2]{0}', space=sflag, size = 0x8, scoped, tag = 'scoped memory for tpu_custom_call.1']
    #allocation7 [shape = 'u8[131072]{0}', space=vmem, size = 0x20000, scoped, tag = 'input window, operand 1']
    #allocation8 [shape = 's32[2]{0}', space=sflag, size = 0x8, scoped, tag = 'scoped memory for tpu_custom_call.1']
    #allocation9 [shape = 'u8[131072]{0}', space=vmem, size = 0x20000, scoped, tag = 'input window, operand 2']
    #allocation10 [shape = 'u8[512]{0}', space=smem, size = 0x200, scoped, tag = 'input window, operand 3, single buffered']
    #allocation11 [shape = 'u8[512]{0}', space=smem, size = 0x200, scoped, tag = 'input window, operand 4, single buffered']
    #allocation12 [shape = 's32[1]{0}', space=sflag, size = 0x4, scoped, tag = 'scoped memory for tpu_custom_call.1']
    #allocation13 [shape = 'u8[163840]{0}', space=vmem, size = 0x28000, scoped, tag = 'output window, operand 0']
    %10 = vsyncpa [#allocation4], 0
    %s11 = scalar_lea.sflag [#allocation4], 1
    %12 = vsyncpa %s11, 0
    %13 = vsyncpa [#allocation8], 0
    %s14 = scalar_lea.sflag [#allocation8], 1
    %15 = vsyncpa %s14, 0
    %16 = vsyncpa [#allocation6], 0
    %17 = vsyncpa [#allocation12], 0
    %18 = vsyncpa [#allocation5], 0
    %s19 = scalar_lea.sflag [#allocation5], 1
    %20 = vsyncpa %s19, 0
    loop: start=0, step=1, limit=6
    $region2: #{tpu_custom_call.1} parent=1 // loop_pre_header
      _
    $region3: #{tpu_custom_call.1} parent=1 // loop_header
      %s22 = sphi 0, %s26
      %p23 = scmp.ge.s32.totalorder %s22, 6
      %s29 = sphi 0, %s41
      %s30 = sphi 0, %s37
      %s31 = sphi 0, %s29
      %s32 = sphi 0, %s30
      %s33 = sphi 0, %s31
      %s34 = sphi 0, %s32
      %s46 = sphi 0, %s48
      %s49 = sphi 0, %s46
      %s50 = sphi 0, %s49
      %s66 = sphi 0, %s50
      %s74 = sphi 0, %s76
      %s77 = sphi 0, %s74
      %s78 = sphi 0, %s77
      %s94 = sphi 0, %s78
      %s102 = sphi 0, %s104
      %s105 = sphi 0, %s102
      %s106 = sphi 0, %s105
      %s122 = sphi 0, %s106
      %s126 = sphi 0, %s126
      %s128 = sphi 0, %s126
      %s129 = sphi 0, %s128
      %s143 = sphi 0, %s129
      %s147 = sphi 0, %s147
      %s149 = sphi 0, %s147
      %s150 = sphi 0, %s149
      %s164 = sphi 0, %s150
      %s172 = sphi 0, %s174
      %s175 = sphi 0, %s172
      %s176 = sphi 0, %s175
      %s192 = sphi 0, %s176
    $region4: #{tpu_custom_call.1} parent=1 // loop_header_branch
      %25 = sbr.rel (%p23) target = $region8
    $region5: #{tpu_custom_call.1} parent=1 // loop_body
      %s27 = ssub.s32 %s22, 1
      %s28 = ssub.s32 %s22, 2
      %s35 = sadd.s32 1, %s30
      %p36 = scmp.ge.s32.totalorder %s35, 2
      %s37 = scalar_select %p36, 0, %s35
      %s38 = sadd.s32 1, %s29
      %s39 = scalar_select %p36, %s38, %s29
      %p40 = scmp.ge.s32.totalorder %s39, 2
      %s41 = scalar_select %p40, 0, %s39
      %s42 = ssub.s32 %s29, %s41
      %s43 = ssub.s32 %s30, %s37
      %s44 = sor.u32 %s42, %s43
      %p45 = scmp.eq.s32.totalorder %s44, 0
      %s47 = sadd.s32 %s46, 1
      %s48 = scalar_select %p45, %s46, %s47
      %p51 = pneg %p45
      %p52 = scmp.eq.s32.totalorder %s22, 3
      %p53 = por %p51, %p52
      %p54 = scmp.ne.s32.totalorder %s46, %s49
      %p55 = scmp.eq.s32.totalorder %s22, 0
      %p56 = por %p54, %p55
      %p57 = scmp.ne.s32.totalorder %s46, %s49
      %p58 = scmp.eq.s32.totalorder %s27, 3
      %p59 = por %p57, %p58
      %p60 = scmp.ne.s32.totalorder %s49, %s50
      %p61 = scmp.eq.s32.totalorder %s27, 0
      %p62 = por %p60, %p61
      %p63 = scmp.ne.s32.totalorder %s49, %s50
      %p64 = scmp.eq.s32.totalorder %s28, 3
      %p65 = por %p63, %p64
      %p67 = scmp.ne.s32.totalorder %s50, %s66
      %p68 = scmp.eq.s32.totalorder %s28, 0
      %p69 = por %p67, %p68
      %s70 = ssub.s32 %s29, %s41
      %s71 = ssub.s32 %s30, %s37
      %s72 = sor.u32 %s70, %s71
      %p73 = scmp.eq.s32.totalorder %s72, 0
      %s75 = sadd.s32 %s74, 1
      %s76 = scalar_select %p73, %s74, %s75
      %p79 = pneg %p73
      %p80 = scmp.eq.s32.totalorder %s22, 3
      %p81 = por %p79, %p80
      %p82 = scmp.ne.s32.totalorder %s74, %s77
      %p83 = scmp.eq.s32.totalorder %s22, 0
      %p84 = por %p82, %p83
      %p85 = scmp.ne.s32.totalorder %s74, %s77
      %p86 = scmp.eq.s32.totalorder %s27, 3
      %p87 = por %p85, %p86
      %p88 = scmp.ne.s32.totalorder %s77, %s78
      %p89 = scmp.eq.s32.totalorder %s27, 0
      %p90 = por %p88, %p89
      %p91 = scmp.ne.s32.totalorder %s77, %s78
      %p92 = scmp.eq.s32.totalorder %s28, 3
      %p93 = por %p91, %p92
      %p95 = scmp.ne.s32.totalorder %s78, %s94
      %p96 = scmp.eq.s32.totalorder %s28, 0
      %p97 = por %p95, %p96
      %s98 = ssub.s32 %s29, %s41
      %s99 = ssub.s32 %s30, %s37
      %s100 = sor.u32 %s98, %s99
      %p101 = scmp.eq.s32.totalorder %s100, 0
      %s103 = sadd.s32 %s102, 1
      %s104 = scalar_select %p101, %s102, %s103
      %p107 = pneg %p101
      %p108 = scmp.eq.s32.totalorder %s22, 3
      %p109 = por %p107, %p108
      %p110 = scmp.ne.s32.totalorder %s102, %s105
      %p111 = scmp.eq.s32.totalorder %s22, 0
      %p112 = por %p110, %p111
      %p113 = scmp.ne.s32.totalorder %s102, %s105
      %p114 = scmp.eq.s32.totalorder %s27, 3
      %p115 = por %p113, %p114
      %p116 = scmp.ne.s32.totalorder %s105, %s106
      %p117 = scmp.eq.s32.totalorder %s27, 0
      %p118 = por %p116, %p117
      %p119 = scmp.ne.s32.totalorder %s105, %s106
      %p120 = scmp.eq.s32.totalorder %s28, 3
      %p121 = por %p119, %p120
      %p123 = scmp.ne.s32.totalorder %s106, %s122
      %p124 = scmp.eq.s32.totalorder %s28, 0
      %p125 = por %p123, %p124
      %s127 = sadd.s32 %s126, 1
      %p130 = scmp.eq.s32.totalorder %s22, 3
      %p131 = scmp.ne.s32.totalorder %s126, %s128
      %p132 = scmp.eq.s32.totalorder %s22, 0
      %p133 = por %p131, %p132
      %p134 = scmp.ne.s32.totalorder %s126, %s128
      %p135 = scmp.eq.s32.totalorder %s27, 3
      %p136 = por %p134, %p135
      %p137 = scmp.ne.s32.totalorder %s128, %s129
      %p138 = scmp.eq.s32.totalorder %s27, 0
      %p139 = por %p137, %p138
      %p140 = scmp.ne.s32.totalorder %s128, %s129
      %p141 = scmp.eq.s32.totalorder %s28, 3
      %p142 = por %p140, %p141
      %p144 = scmp.ne.s32.totalorder %s129, %s143
      %p145 = scmp.eq.s32.totalorder %s28, 0
      %p146 = por %p144, %p145
      %s148 = sadd.s32 %s147, 1
      %p151 = scmp.eq.s32.totalorder %s22, 3
      %p152 = scmp.ne.s32.totalorder %s147, %s149
      %p153 = scmp.eq.s32.totalorder %s22, 0
      %p154 = por %p152, %p153
      %p155 = scmp.ne.s32.totalorder %s147, %s149
      %p156 = scmp.eq.s32.totalorder %s27, 3
      %p157 = por %p155, %p156
      %p158 = scmp.ne.s32.totalorder %s149, %s150
      %p159 = scmp.eq.s32.totalorder %s27, 0
      %p160 = por %p158, %p159
      %p161 = scmp.ne.s32.totalorder %s149, %s150
      %p162 = scmp.eq.s32.totalorder %s28, 3
      %p163 = por %p161, %p162
      %p165 = scmp.ne.s32.totalorder %s150, %s164
      %p166 = scmp.eq.s32.totalorder %s28, 0
      %p167 = por %p165, %p166
      %s168 = ssub.s32 %s29, %s41
      %s169 = ssub.s32 %s30, %s37
      %s170 = sor.u32 %s168, %s169
      %p171 = scmp.eq.s32.totalorder %s170, 0
      %s173 = sadd.s32 %s172, 1
      %s174 = scalar_select %p171, %s172, %s173
      %p177 = pneg %p171
      %p178 = scmp.eq.s32.totalorder %s22, 3
      %p179 = por %p177, %p178
      %p180 = scmp.ne.s32.totalorder %s172, %s175
      %p181 = scmp.eq.s32.totalorder %s22, 0
      %p182 = por %p180, %p181
      %p183 = scmp.ne.s32.totalorder %s172, %s175
      %p184 = scmp.eq.s32.totalorder %s27, 3
      %p185 = por %p183, %p184
      %p186 = scmp.ne.s32.totalorder %s175, %s176
      %p187 = scmp.eq.s32.totalorder %s27, 0
      %p188 = por %p186, %p187
      %p189 = scmp.ne.s32.totalorder %s175, %s176
      %p190 = scmp.eq.s32.totalorder %s28, 3
      %p191 = por %p189, %p190
      %p193 = scmp.ne.s32.totalorder %s176, %s192
      %p194 = scmp.eq.s32.totalorder %s28, 0
      %p195 = por %p193, %p194
      %p196 = scmp.le.s32.totalorder 1, %s22
      %p197 = scmp.lt.s32.totalorder %s22, 5
      %p198 = pnand %p196, %p197
      %p199 = pneg %p198
      // Predicated region
      $region9: #{tpu_custom_call.1} parent=5 // pred_check
        _
      $region10: #{tpu_custom_call.1} parent=5 // pred_check_branch
        %201 = sbr.rel (%p198) target = $region12
      $region11: #{tpu_custom_call.1} parent=5 // pred_region
        %s202 = ssub.s32 %s22, 1
        // Predicated region
        $region13: #{tpu_custom_call.1} parent=11 // pred_check
          %p203 = pneg %p139
        $region14: #{tpu_custom_call.1} parent=11 // pred_check_branch
          %205 = sbr.rel (%p203) target = $region16
        $region15: #{tpu_custom_call.1} parent=11 // pred_region
          %s207 = ssub.s32 16, 16
          %208 = vsyncadd [#allocation6], %s207
          %s210 = sshll.u32 %s3, 4
          %s211 = int_to_ptr.vmem [resolvable:$true] %s210
          %213 = dma.vmem_to_smem %s211, 16, [#allocation10], [#allocation6]
        $region16: #{tpu_custom_call.1} parent=11 // pred_fallthru
          _
        // Predicated region
        $region17: #{tpu_custom_call.1} parent=11 // pred_check
          %p214 = pneg %p160
        $region18: #{tpu_custom_call.1} parent=11 // pred_check_branch
          %216 = sbr.rel (%p214) target = $region20
        $region19: #{tpu_custom_call.1} parent=11 // pred_region
          %s218 = ssub.s32 16, 16
          %219 = vsyncadd [#allocation12], %s218
          %s221 = sshll.u32 %s4, 4
          %s222 = int_to_ptr.vmem [resolvable:$true] %s221
          %224 = dma.vmem_to_smem %s222, 16, [#allocation11], [#allocation12]
        $region20: #{tpu_custom_call.1} parent=11 // pred_fallthru
          _
      $region12: #{tpu_custom_call.1} parent=5 // pred_fallthru
        _
      %p225 = scmp.lt.s32.totalorder %s22, 4
      // Predicated region
      $region21: #{tpu_custom_call.1} parent=5 // pred_check
        %p226 = pneg %p225
      $region22: #{tpu_custom_call.1} parent=5 // pred_check_branch
        %228 = sbr.rel (%p226) target = $region24
      $region23: #{tpu_custom_call.1} parent=5 // pred_region
        // Predicated region
        $region25: #{tpu_custom_call.1} parent=23 // pred_check
          %p229 = pneg %p56
        $region26: #{tpu_custom_call.1} parent=23 // pred_check_branch
          %231 = sbr.rel (%p229) target = $region28
        $region27: #{tpu_custom_call.1} parent=23 // pred_region
          %s232 = sand.u32 %s46, 1
          %s233 = scalar_lea.sflag [#allocation4], %s232
          %s234 = sand.u32 %s46, 1
          %s235 = smul.addr %s234, 128
          %s236 = scalar_lea.vmem [#allocation3], %s235
          %s238 = ssub.s32 2048, 2048
          %239 = vsyncadd %s233, %s238
          %s240 = smul.addr %s29, 32
          %s241 = sadd.s32 %s30, %s240
          %s242 = smul.addr %s241, 128
          %s243 = scalar_lea.hbm %s0, %s242
          %s244 = sshll.u32 %s236, 4
          %s245 = int_to_ptr.vmem [resolvable:$true] %s244
          %250 = dma.hbm_to_vmem [thread:$0]  %s243, 2048, %s245, %s233, 256, 128, 8
        $region28: #{tpu_custom_call.1} parent=23 // pred_fallthru
          _
        // Predicated region
        $region29: #{tpu_custom_call.1} parent=23 // pred_check
          %p251 = pneg %p84
        $region30: #{tpu_custom_call.1} parent=23 // pred_check_branch
          %253 = sbr.rel (%p251) target = $region32
        $region31: #{tpu_custom_call.1} parent=23 // pred_region
          %s254 = sand.u32 %s22, 1
          %s255 = scalar_lea.sflag [#allocation8], %s254
          %s256 = sand.u32 %s74, 1
          %s257 = smul.addr %s256, 128
          %s258 = scalar_lea.vmem [#allocation7], %s257
          %s260 = ssub.s32 2048, 2048
          %261 = vsyncadd %s255, %s260
          %s262 = smul.addr %s29, 32
          %s263 = sadd.s32 %s30, %s262
          %s264 = smul.addr %s263, 128
          %s265 = scalar_lea.hbm %s1, %s264
          %s266 = sshll.u32 %s258, 4
          %s267 = int_to_ptr.vmem [resolvable:$true] %s266
          %272 = dma.hbm_to_vmem [thread:$0]  %s265, 2048, %s267, %s255, 256, 128, 8
        $region32: #{tpu_custom_call.1} parent=23 // pred_fallthru
          _
        // Predicated region
        $region33: #{tpu_custom_call.1} parent=23 // pred_check
          %p273 = pneg %p112
        $region34: #{tpu_custom_call.1} parent=23 // pred_check_branch
          %275 = sbr.rel (%p273) target = $region36
        $region35: #{tpu_custom_call.1} parent=23 // pred_region
          %s276 = sand.u32 %s22, 1
          %s277 = scalar_lea.sflag [#allocation8], %s276
          %s278 = sand.u32 %s102, 1
          %s279 = smul.addr %s278, 128
          %s280 = scalar_lea.vmem [#allocation9], %s279
          %s282 = ssub.s32 2048, 2048
          %283 = vsyncadd %s277, %s282
          %s284 = smul.addr %s29, 32
          %s285 = sadd.s32 %s30, %s284
          %s286 = smul.addr %s285, 128
          %s287 = scalar_lea.hbm %s2, %s286
          %s288 = sshll.u32 %s280, 4
          %s289 = int_to_ptr.vmem [resolvable:$true] %s288
          %294 = dma.hbm_to_vmem [thread:$0]  %s287, 2048, %s289, %s277, 256, 128, 8
        $region36: #{tpu_custom_call.1} parent=23 // pred_fallthru
          _
      $region24: #{tpu_custom_call.1} parent=5 // pred_fallthru
        _
      %p295 = scmp.le.s32.totalorder 1, %s22
      %p296 = scmp.lt.s32.totalorder %s22, 5
      %p297 = pnand %p295, %p296
      %p298 = pneg %p297
      // Predicated region
      $region37: #{tpu_custom_call.1} parent=5 // pred_check
        _
      $region38: #{tpu_custom_call.1} parent=5 // pred_check_branch
        %300 = sbr.rel (%p297) target = $region40
      $region39: #{tpu_custom_call.1} parent=5 // pred_region
        %s301 = ssub.s32 %s22, 1
        %s302 = sand.u32 %s49, 1
        %s303 = scalar_lea.sflag [#allocation4], %s302
        %s304 = sand.u32 %s49, 1
        %s305 = smul.addr %s304, 128
        %s306 = scalar_lea.vmem [#allocation3], %s305
        // Predicated region
        $region41: #{tpu_custom_call.1} parent=39 // pred_check
          %p307 = pneg %p62
        $region42: #{tpu_custom_call.1} parent=39 // pred_check_branch
          %309 = sbr.rel (%p307) target = $region44
        $region43: #{tpu_custom_call.1} parent=39 // pred_region
          %310 = dma.done %s303, 2048
        $region44: #{tpu_custom_call.1} parent=39 // pred_fallthru
          _
        %s311 = sand.u32 %s27, 1
        %s312 = scalar_lea.sflag [#allocation8], %s311
        %s313 = sand.u32 %s77, 1
        %s314 = smul.addr %s313, 128
        %s315 = scalar_lea.vmem [#allocation7], %s314
        // Predicated region
        $region45: #{tpu_custom_call.1} parent=39 // pred_check
          %p316 = pneg %p90
        $region46: #{tpu_custom_call.1} parent=39 // pred_check_branch
          %318 = sbr.rel (%p316) target = $region48
        $region47: #{tpu_custom_call.1} parent=39 // pred_region
          %319 = dma.done %s312, 2048
        $region48: #{tpu_custom_call.1} parent=39 // pred_fallthru
          _
        %s320 = sand.u32 %s27, 1
        %s321 = scalar_lea.sflag [#allocation8], %s320
        %s322 = sand.u32 %s105, 1
        %s323 = smul.addr %s322, 128
        %s324 = scalar_lea.vmem [#allocation9], %s323
        // Predicated region
        $region49: #{tpu_custom_call.1} parent=39 // pred_check
          %p325 = pneg %p118
        $region50: #{tpu_custom_call.1} parent=39 // pred_check_branch
          %327 = sbr.rel (%p325) target = $region52
        $region51: #{tpu_custom_call.1} parent=39 // pred_region
          %328 = dma.done %s321, 2048
        $region52: #{tpu_custom_call.1} parent=39 // pred_fallthru
          _
        // Predicated region
        $region53: #{tpu_custom_call.1} parent=39 // pred_check
          %p329 = pneg %p139
        $region54: #{tpu_custom_call.1} parent=39 // pred_check_branch
          %331 = sbr.rel (%p329) target = $region56
        $region55: #{tpu_custom_call.1} parent=39 // pred_region
          %332 = dma.done [#allocation6], 16
        $region56: #{tpu_custom_call.1} parent=39 // pred_fallthru
          _
        // Predicated region
        $region57: #{tpu_custom_call.1} parent=39 // pred_check
          %p333 = pneg %p160
        $region58: #{tpu_custom_call.1} parent=39 // pred_check_branch
          %335 = sbr.rel (%p333) target = $region60
        $region59: #{tpu_custom_call.1} parent=39 // pred_region
          %336 = dma.done [#allocation12], 16
        $region60: #{tpu_custom_call.1} parent=39 // pred_fallthru
          _
        %337 = sfence
        %s338 = sand.u32 %s49, 1
        %s339 = scalar_lea.sflag [#allocation4], %s338
        %s340 = sand.u32 %s49, 1
        %s341 = smul.addr %s340, 128
        %s342 = scalar_lea.vmem [#allocation3], %s341
        %p343 = pneg %p62
        %p344 = pneg %p59
        %s345 = sand.u32 %s27, 1
        %s346 = scalar_lea.sflag [#allocation8], %s345
        %s347 = sand.u32 %s77, 1
        %s348 = smul.addr %s347, 128
        %s349 = scalar_lea.vmem [#allocation7], %s348
        %p350 = pneg %p90
        %p351 = pneg %p87
        %s352 = sand.u32 %s27, 1
        %s353 = scalar_lea.sflag [#allocation8], %s352
        %s354 = sand.u32 %s105, 1
        %s355 = smul.addr %s354, 128
        %s356 = scalar_lea.vmem [#allocation9], %s355
        %p357 = pneg %p118
        %p358 = pneg %p115
        %p359 = pneg %p139
        %p360 = pneg %p136
        %p361 = pneg %p160
        %p362 = pneg %p157
        %p363 = pneg %p188
        %p364 = pneg %p185
        %s365 = sand.u32 %s175, 1
        %s366 = scalar_lea.sflag [#allocation5], %s365
        %s367 = sand.u32 %s175, 1
        %s368 = smul.addr %s367, 160
        %s369 = scalar_lea.vmem [#allocation13], %s368
        %p371 = scmp.lt.u32.totalorder 128, 8
        %p372 = pneg %p371
        // Predicated region
        $region61: #{tpu_custom_call.1} parent=39 // pred_check
          _
        $region62: #{tpu_custom_call.1} parent=39 // pred_check_branch
          %374 = sbr.rel (%p371) target = $region64
        $region63: #{tpu_custom_call.1} parent=39 // pred_region
          %s390 = sand.u32 128, 7
          %p391 = scmp.eq.s32.totalorder %s390, 0
          // Predicated region
          $region76: #{tpu_custom_call.1} parent=63 // pred_check
            %p392 = pneg %p391
          $region77: #{tpu_custom_call.1} parent=63 // pred_check_branch
            %394 = sbr.rel (%p392) target = $region79
          $region78: #{tpu_custom_call.1} parent=63 // pred_region
            loop: start=0, step=1, limit=1
            $region80: #{tpu_custom_call.1} parent=78 // loop_pre_header
              _
            $region81: #{tpu_custom_call.1} parent=78 // loop_header
              %s396 = sphi 0, %s400
              %p397 = scmp.ge.s32.totalorder %s396, 1
              %s401 = sphi %s324, %s324
              %s402 = sphi %s369, %s369
            $region82: #{tpu_custom_call.1} parent=78 // loop_header_branch
              %399 = sbr.rel (%p397) target = $region86
            $region83: #{tpu_custom_call.1} parent=78 // loop_body
              %v403 = vld [vmem:[%s401] sm:$0xff]
              %404 = vst [vmem:[%s402] sm:$0xff] %v403
              %v405 = vld [vmem:[%s401 + $0x8] sm:$0xff]
              %406 = vst [vmem:[%s402 + $0x8] sm:$0xff] %v405
              %v407 = vld [vmem:[%s401 + $0x10] sm:$0xff]
              %408 = vst [vmem:[%s402 + $0x10] sm:$0xff] %v407
              %v409 = vld [vmem:[%s401 + $0x18] sm:$0xff]
              %410 = vst [vmem:[%s402 + $0x18] sm:$0xff] %v409
              %v411 = vld [vmem:[%s401 + $0x20] sm:$0xff]
              %412 = vst [vmem:[%s402 + $0x20] sm:$0xff] %v411
              %v413 = vld [vmem:[%s401 + $0x28] sm:$0xff]
              %414 = vst [vmem:[%s402 + $0x28] sm:$0xff] %v413
              %v415 = vld [vmem:[%s401 + $0x30] sm:$0xff]
              %416 = vst [vmem:[%s402 + $0x30] sm:$0xff] %v415
              %v417 = vld [vmem:[%s401 + $0x38] sm:$0xff]
              %418 = vst [vmem:[%s402 + $0x38] sm:$0xff] %v417
              %v419 = vld [vmem:[%s401 + $0x40] sm:$0xff]
              %420 = vst [vmem:[%s402 + $0x40] sm:$0xff] %v419
              %v421 = vld [vmem:[%s401 + $0x48] sm:$0xff]
              %422 = vst [vmem:[%s402 + $0x48] sm:$0xff] %v421
              %v423 = vld [vmem:[%s401 + $0x50] sm:$0xff]
              %424 = vst [vmem:[%s402 + $0x50] sm:$0xff] %v423
              %v425 = vld [vmem:[%s401 + $0x58] sm:$0xff]
              %426 = vst [vmem:[%s402 + $0x58] sm:$0xff] %v425
              %v427 = vld [vmem:[%s401 + $0x60] sm:$0xff]
              %428 = vst [vmem:[%s402 + $0x60] sm:$0xff] %v427
              %v429 = vld [vmem:[%s401 + $0x68] sm:$0xff]
              %430 = vst [vmem:[%s402 + $0x68] sm:$0xff] %v429
              %v431 = vld [vmem:[%s401 + $0x70] sm:$0xff]
              %432 = vst [vmem:[%s402 + $0x70] sm:$0xff] %v431
              %v433 = vld [vmem:[%s401 + $0x78] sm:$0xff]
              %434 = vst [vmem:[%s402 + $0x78] sm:$0xff] %v433
            $region84: #{tpu_custom_call.1} parent=78 // loop_footer
              %s400 = sadd.s32 1, %s396
            $region85: #{tpu_custom_call.1} parent=78 // loop_footer_branch
              %395 = sbr.rel target = $region81
            $region86: #{tpu_custom_call.1} parent=78 // loop_exit
              _
          $region79: #{tpu_custom_call.1} parent=63 // pred_fallthru
            _
          %p435 = pneg %p391
          // Predicated region
          $region87: #{tpu_custom_call.1} parent=63 // pred_check
            _
          $region88: #{tpu_custom_call.1} parent=63 // pred_check_branch
            %437 = sbr.rel (%p391) target = $region90
          $region89: #{tpu_custom_call.1} parent=63 // pred_region
            %s438 = sand.u32 128, 7
          $region90: #{tpu_custom_call.1} parent=63 // pred_fallthru
            _
        $region64: #{tpu_custom_call.1} parent=39 // pred_fallthru
          _
        // Predicated region
        $region65: #{tpu_custom_call.1} parent=39 // pred_check
          %p375 = pneg %p371
        $region66: #{tpu_custom_call.1} parent=39 // pred_check_branch
          %377 = sbr.rel (%p375) target = $region68
        $region67: #{tpu_custom_call.1} parent=39 // pred_region
          %s378 = sshll.u32 1, 128
          %s379 = ssub.s32 %s378, 1
          loop: start=0, step=1, limit=1
          $region69: #{tpu_custom_call.1} parent=67 // loop_pre_header
            _
          $region70: #{tpu_custom_call.1} parent=67 // loop_header
            %s381 = sphi 0, %s385
            %p382 = scmp.ge.s32.totalorder %s381, 1
            %s386 = sphi %s324, %s324
            %s387 = sphi %s369, %s369
          $region71: #{tpu_custom_call.1} parent=67 // loop_header_branch
            %384 = sbr.rel (%p382) target = $region75
          $region72: #{tpu_custom_call.1} parent=67 // loop_body
            %v388 = vld [vmem:[%s386] sm:%s379]
            %389 = vst [vmem:[%s387] sm:%s379] %v388
          $region73: #{tpu_custom_call.1} parent=67 // loop_footer
            %s385 = sadd.s32 1, %s381
          $region74: #{tpu_custom_call.1} parent=67 // loop_footer_branch
            %380 = sbr.rel target = $region70
          $region75: #{tpu_custom_call.1} parent=67 // loop_exit
            _
        $region68: #{tpu_custom_call.1} parent=39 // pred_fallthru
          _
        // Predicated region
        $region91: #{tpu_custom_call.1} parent=39 // pred_check
          _
        $region92: #{tpu_custom_call.1} parent=39 // pred_check_branch
          %441 = sbr.rel (0) target = $region94
        $region93: #{tpu_custom_call.1} parent=39 // pred_region
          %442 = vsyncadd [#allocation2], 2048
        $region94: #{tpu_custom_call.1} parent=39 // pred_fallthru
          _
        %v443 = vld [vmem:[%s306] sm:$0xff]
        %v444 = vld [vmem:[%s306 + $0x8] sm:$0xff]
        %v445 = vld [vmem:[%s306 + $0x10] sm:$0xff]
        %v446 = vld [vmem:[%s306 + $0x18] sm:$0xff]
        %v447 = vld [vmem:[%s306 + $0x20] sm:$0xff]
        %v448 = vld [vmem:[%s306 + $0x28] sm:$0xff]
        %v449 = vld [vmem:[%s306 + $0x30] sm:$0xff]
        %v450 = vld [vmem:[%s306 + $0x38] sm:$0xff]
        %v451 = vld [vmem:[%s315] sm:$0xff]
        %v452 = vld [vmem:[%s315 + $0x8] sm:$0xff]
        %v453 = vld [vmem:[%s315 + $0x10] sm:$0xff]
        %v454 = vld [vmem:[%s315 + $0x18] sm:$0xff]
        %v455 = vld [vmem:[%s315 + $0x20] sm:$0xff]
        %v456 = vld [vmem:[%s315 + $0x28] sm:$0xff]
        %v457 = vld [vmem:[%s315 + $0x30] sm:$0xff]
        %v458 = vld [vmem:[%s315 + $0x38] sm:$0xff]
        %459 = vrot.lane.b32.xlu0 %v451, 1
        %v460 = vpop.permute.xlu0 %459
        %461 = vrot.lane.b32.xlu0 %v452, 1
        %v462 = vpop.permute.xlu0 %461
        %463 = vrot.lane.b32.xlu0 %v453, 1
        %v464 = vpop.permute.xlu0 %463
        %465 = vrot.lane.b32.xlu0 %v454, 1
        %v466 = vpop.permute.xlu0 %465
        %467 = vrot.lane.b32.xlu0 %v455, 1
        %v468 = vpop.permute.xlu0 %467
        %469 = vrot.lane.b32.xlu0 %v456, 1
        %v470 = vpop.permute.xlu0 %469
        %471 = vrot.lane.b32.xlu0 %v457, 1
        %v472 = vpop.permute.xlu0 %471
        %473 = vrot.lane.b32.xlu0 %v458, 1
        %v474 = vpop.permute.xlu0 %473
        %v475 = vmul.f32 %v443, %v460
        %v476 = vmul.f32 %v444, %v462
        %v477 = vmul.f32 %v445, %v464
        %v478 = vmul.f32 %v446, %v466
        %v479 = vmul.f32 %v447, %v468
        %v480 = vmul.f32 %v448, %v470
        %v481 = vmul.f32 %v449, %v472
        %v482 = vmul.f32 %v450, %v474
        %v483 = vadd.f32 %v475, %v476
        %v484 = vadd.f32 %v483, %v477
        %v485 = vadd.f32 %v484, %v478
        %v486 = vadd.f32 %v485, %v479
        %v487 = vadd.f32 %v486, %v480
        %v488 = vadd.f32 %v487, %v481
        %v489 = vadd.f32 %v488, %v482
        %s490 = sld [smem:[#allocation10]]
        %v491 = vstv %s490
        %v492 = vmul.f32 %v491, %v489
        %s493 = scalar_lea.vmem %s306, 64 [#allocation3]
        %v494 = vld [vmem:[%s493] sm:$0xff]
        %v495 = vld [vmem:[%s493 + $0x8] sm:$0xff]
        %v496 = vld [vmem:[%s493 + $0x10] sm:$0xff]
        %v497 = vld [vmem:[%s493 + $0x18] sm:$0xff]
        %v498 = vld [vmem:[%s493 + $0x20] sm:$0xff]
        %v499 = vld [vmem:[%s493 + $0x28] sm:$0xff]
        %v500 = vld [vmem:[%s493 + $0x30] sm:$0xff]
        %v501 = vld [vmem:[%s493 + $0x38] sm:$0xff]
        %s502 = scalar_lea.vmem %s315, 64 [#allocation7]
        %v503 = vld [vmem:[%s502] sm:$0xff]
        %v504 = vld [vmem:[%s502 + $0x8] sm:$0xff]
        %v505 = vld [vmem:[%s502 + $0x10] sm:$0xff]
        %v506 = vld [vmem:[%s502 + $0x18] sm:$0xff]
        %v507 = vld [vmem:[%s502 + $0x20] sm:$0xff]
        %v508 = vld [vmem:[%s502 + $0x28] sm:$0xff]
        %v509 = vld [vmem:[%s502 + $0x30] sm:$0xff]
        %v510 = vld [vmem:[%s502 + $0x38] sm:$0xff]
        %511 = vrot.lane.b32.xlu0 %v503, 1
        %v512 = vpop.permute.xlu0 %511
        %513 = vrot.lane.b32.xlu0 %v504, 1
        %v514 = vpop.permute.xlu0 %513
        %515 = vrot.lane.b32.xlu0 %v505, 1
        %v516 = vpop.permute.xlu0 %515
        %517 = vrot.lane.b32.xlu0 %v506, 1
        %v518 = vpop.permute.xlu0 %517
        %519 = vrot.lane.b32.xlu0 %v507, 1
        %v520 = vpop.permute.xlu0 %519
        %521 = vrot.lane.b32.xlu0 %v508, 1
        %v522 = vpop.permute.xlu0 %521
        %523 = vrot.lane.b32.xlu0 %v509, 1
        %v524 = vpop.permute.xlu0 %523
        %525 = vrot.lane.b32.xlu0 %v510, 1
        %v526 = vpop.permute.xlu0 %525
        %v527 = vmul.f32 %v494, %v512
        %v528 = vmul.f32 %v495, %v514
        %v529 = vmul.f32 %v496, %v516
        %v530 = vmul.f32 %v497, %v518
        %v531 = vmul.f32 %v498, %v520
        %v532 = vmul.f32 %v499, %v522
        %v533 = vmul.f32 %v500, %v524
        %v534 = vmul.f32 %v501, %v526
        %v535 = vadd.f32 %v527, %v528
        %v536 = vadd.f32 %v535, %v529
        %v537 = vadd.f32 %v536, %v530
        %v538 = vadd.f32 %v537, %v531
        %v539 = vadd.f32 %v538, %v532
        %v540 = vadd.f32 %v539, %v533
        %v541 = vadd.f32 %v540, %v534
        %s542 = sld [smem:[#allocation10 + $0x1]]
        %v543 = vstv %s542
        %v544 = vmul.f32 %v543, %v541
        %v545 = vadd.f32 %v492, %v544
        %s546 = sld [smem:[#allocation11]]
        %v547 = vstv %s546
        %v548 = vadd.f32 %v545, %v547
        %s549 = scalar_lea.vmem %s369, 128 [#allocation13]
        %550 = vst [vmem:[%s549] sm:$0xff] %v548
        %v551 = vld [vmem:[%s306] sm:$0xff]
        %v552 = vld [vmem:[%s306 + $0x8] sm:$0xff]
        %v553 = vld [vmem:[%s306 + $0x10] sm:$0xff]
        %v554 = vld [vmem:[%s306 + $0x18] sm:$0xff]
        %v555 = vld [vmem:[%s306 + $0x20] sm:$0xff]
        %v556 = vld [vmem:[%s306 + $0x28] sm:$0xff]
        %v557 = vld [vmem:[%s306 + $0x30] sm:$0xff]
        %v558 = vld [vmem:[%s306 + $0x38] sm:$0xff]
        %v559 = vld [vmem:[%s315] sm:$0xff]
        %v560 = vld [vmem:[%s315 + $0x8] sm:$0xff]
        %v561 = vld [vmem:[%s315 + $0x10] sm:$0xff]
        %v562 = vld [vmem:[%s315 + $0x18] sm:$0xff]
        %v563 = vld [vmem:[%s315 + $0x20] sm:$0xff]
        %v564 = vld [vmem:[%s315 + $0x28] sm:$0xff]
        %v565 = vld [vmem:[%s315 + $0x30] sm:$0xff]
        %v566 = vld [vmem:[%s315 + $0x38] sm:$0xff]
        %567 = vrot.lane.b32.xlu0 %v559, 2
        %v568 = vpop.permute.xlu0 %567
        %569 = vrot.lane.b32.xlu0 %v560, 2
        %v570 = vpop.permute.xlu0 %569
        %571 = vrot.lane.b32.xlu0 %v561, 2
        %v572 = vpop.permute.xlu0 %571
        %573 = vrot.lane.b32.xlu0 %v562, 2
        %v574 = vpop.permute.xlu0 %573
        %575 = vrot.lane.b32.xlu0 %v563, 2
        %v576 = vpop.permute.xlu0 %575
        %577 = vrot.lane.b32.xlu0 %v564, 2
        %v578 = vpop.permute.xlu0 %577
        %579 = vrot.lane.b32.xlu0 %v565, 2
        %v580 = vpop.permute.xlu0 %579
        %581 = vrot.lane.b32.xlu0 %v566, 2
        %v582 = vpop.permute.xlu0 %581
        %v583 = vmul.f32 %v551, %v568
        %v584 = vmul.f32 %v552, %v570
        %v585 = vmul.f32 %v553, %v572
        %v586 = vmul.f32 %v554, %v574
        %v587 = vmul.f32 %v555, %v576
        %v588 = vmul.f32 %v556, %v578
        %v589 = vmul.f32 %v557, %v580
        %v590 = vmul.f32 %v558, %v582
        %v591 = vadd.f32 %v583, %v584
        %v592 = vadd.f32 %v591, %v585
        %v593 = vadd.f32 %v592, %v586
        %v594 = vadd.f32 %v593, %v587
        %v595 = vadd.f32 %v594, %v588
        %v596 = vadd.f32 %v595, %v589
        %v597 = vadd.f32 %v596, %v590
        %s598 = sld [smem:[#allocation10 + $0x2]]
        %v599 = vstv %s598
        %v600 = vmul.f32 %v599, %v597
        %v601 = vld [vmem:[%s493] sm:$0xff]
        %v602 = vld [vmem:[%s493 + $0x8] sm:$0xff]
        %v603 = vld [vmem:[%s493 + $0x10] sm:$0xff]
        %v604 = vld [vmem:[%s493 + $0x18] sm:$0xff]
        %v605 = vld [vmem:[%s493 + $0x20] sm:$0xff]
        %v606 = vld [vmem:[%s493 + $0x28] sm:$0xff]
        %v607 = vld [vmem:[%s493 + $0x30] sm:$0xff]
        %v608 = vld [vmem:[%s493 + $0x38] sm:$0xff]
        %v609 = vld [vmem:[%s502] sm:$0xff]
        %v610 = vld [vmem:[%s502 + $0x8] sm:$0xff]
        %v611 = vld [vmem:[%s502 + $0x10] sm:$0xff]
        %v612 = vld [vmem:[%s502 + $0x18] sm:$0xff]
        %v613 = vld [vmem:[%s502 + $0x20] sm:$0xff]
        %v614 = vld [vmem:[%s502 + $0x28] sm:$0xff]
        %v615 = vld [vmem:[%s502 + $0x30] sm:$0xff]
        %v616 = vld [vmem:[%s502 + $0x38] sm:$0xff]
        %617 = vrot.lane.b32.xlu0 %v609, 2
        %v618 = vpop.permute.xlu0 %617
        %619 = vrot.lane.b32.xlu0 %v610, 2
        %v620 = vpop.permute.xlu0 %619
        %621 = vrot.lane.b32.xlu0 %v611, 2
        %v622 = vpop.permute.xlu0 %621
        %623 = vrot.lane.b32.xlu0 %v612, 2
        %v624 = vpop.permute.xlu0 %623
        %625 = vrot.lane.b32.xlu0 %v613, 2
        %v626 = vpop.permute.xlu0 %625
        %627 = vrot.lane.b32.xlu0 %v614, 2
        %v628 = vpop.permute.xlu0 %627
        %629 = vrot.lane.b32.xlu0 %v615, 2
        %v630 = vpop.permute.xlu0 %629
        %631 = vrot.lane.b32.xlu0 %v616, 2
        %v632 = vpop.permute.xlu0 %631
        %v633 = vmul.f32 %v601, %v618
        %v634 = vmul.f32 %v602, %v620
        %v635 = vmul.f32 %v603, %v622
        %v636 = vmul.f32 %v604, %v624
        %v637 = vmul.f32 %v605, %v626
        %v638 = vmul.f32 %v606, %v628
        %v639 = vmul.f32 %v607, %v630
        %v640 = vmul.f32 %v608, %v632
        %v641 = vadd.f32 %v633, %v634
        %v642 = vadd.f32 %v641, %v635
        %v643 = vadd.f32 %v642, %v636
        %v644 = vadd.f32 %v643, %v637
        %v645 = vadd.f32 %v644, %v638
        %v646 = vadd.f32 %v645, %v639
        %v647 = vadd.f32 %v646, %v640
        %s648 = sld [smem:[#allocation10 + $0x3]]
        %v649 = vstv %s648
        %v650 = vmul.f32 %v649, %v647
        %v651 = vadd.f32 %v600, %v650
        %s652 = sld [smem:[#allocation11 + $0x1]]
        %v653 = vstv %s652
        %v654 = vadd.f32 %v651, %v653
        %s655 = scalar_lea.vmem %s369, 136 [#allocation13]
        %656 = vst [vmem:[%s655] sm:$0xff] %v654
        %v657 = vld [vmem:[%s306] sm:$0xff]
        %v658 = vld [vmem:[%s306 + $0x8] sm:$0xff]
        %v659 = vld [vmem:[%s306 + $0x10] sm:$0xff]
        %v660 = vld [vmem:[%s306 + $0x18] sm:$0xff]
        %v661 = vld [vmem:[%s306 + $0x20] sm:$0xff]
        %v662 = vld [vmem:[%s306 + $0x28] sm:$0xff]
        %v663 = vld [vmem:[%s306 + $0x30] sm:$0xff]
        %v664 = vld [vmem:[%s306 + $0x38] sm:$0xff]
        %v665 = vld [vmem:[%s315] sm:$0xff]
        %v666 = vld [vmem:[%s315 + $0x8] sm:$0xff]
        %v667 = vld [vmem:[%s315 + $0x10] sm:$0xff]
        %v668 = vld [vmem:[%s315 + $0x18] sm:$0xff]
        %v669 = vld [vmem:[%s315 + $0x20] sm:$0xff]
        %v670 = vld [vmem:[%s315 + $0x28] sm:$0xff]
        %v671 = vld [vmem:[%s315 + $0x30] sm:$0xff]
        %v672 = vld [vmem:[%s315 + $0x38] sm:$0xff]
        %673 = vrot.lane.b32.xlu0 %v665, 3
        %v674 = vpop.permute.xlu0 %673
        %675 = vrot.lane.b32.xlu0 %v666, 3
        %v676 = vpop.permute.xlu0 %675
        %677 = vrot.lane.b32.xlu0 %v667, 3
        %v678 = vpop.permute.xlu0 %677
        %679 = vrot.lane.b32.xlu0 %v668, 3
        %v680 = vpop.permute.xlu0 %679
        %681 = vrot.lane.b32.xlu0 %v669, 3
        %v682 = vpop.permute.xlu0 %681
        %683 = vrot.lane.b32.xlu0 %v670, 3
        %v684 = vpop.permute.xlu0 %683
        %685 = vrot.lane.b32.xlu0 %v671, 3
        %v686 = vpop.permute.xlu0 %685
        %687 = vrot.lane.b32.xlu0 %v672, 3
        %v688 = vpop.permute.xlu0 %687
        %v689 = vmul.f32 %v657, %v674
        %v690 = vmul.f32 %v658, %v676
        %v691 = vmul.f32 %v659, %v678
        %v692 = vmul.f32 %v660, %v680
        %v693 = vmul.f32 %v661, %v682
        %v694 = vmul.f32 %v662, %v684
        %v695 = vmul.f32 %v663, %v686
        %v696 = vmul.f32 %v664, %v688
        %v697 = vadd.f32 %v689, %v690
        %v698 = vadd.f32 %v697, %v691
        %v699 = vadd.f32 %v698, %v692
        %v700 = vadd.f32 %v699, %v693
        %v701 = vadd.f32 %v700, %v694
        %v702 = vadd.f32 %v701, %v695
        %v703 = vadd.f32 %v702, %v696
        %s704 = sld [smem:[#allocation10 + $0x4]]
        %v705 = vstv %s704
        %v706 = vmul.f32 %v705, %v703
        %v707 = vld [vmem:[%s493] sm:$0xff]
        %v708 = vld [vmem:[%s493 + $0x8] sm:$0xff]
        %v709 = vld [vmem:[%s493 + $0x10] sm:$0xff]
        %v710 = vld [vmem:[%s493 + $0x18] sm:$0xff]
        %v711 = vld [vmem:[%s493 + $0x20] sm:$0xff]
        %v712 = vld [vmem:[%s493 + $0x28] sm:$0xff]
        %v713 = vld [vmem:[%s493 + $0x30] sm:$0xff]
        %v714 = vld [vmem:[%s493 + $0x38] sm:$0xff]
        %v715 = vld [vmem:[%s502] sm:$0xff]
        %v716 = vld [vmem:[%s502 + $0x8] sm:$0xff]
        %v717 = vld [vmem:[%s502 + $0x10] sm:$0xff]
        %v718 = vld [vmem:[%s502 + $0x18] sm:$0xff]
        %v719 = vld [vmem:[%s502 + $0x20] sm:$0xff]
        %v720 = vld [vmem:[%s502 + $0x28] sm:$0xff]
        %v721 = vld [vmem:[%s502 + $0x30] sm:$0xff]
        %v722 = vld [vmem:[%s502 + $0x38] sm:$0xff]
        %723 = vrot.lane.b32.xlu0 %v715, 3
        %v724 = vpop.permute.xlu0 %723
        %725 = vrot.lane.b32.xlu0 %v716, 3
        %v726 = vpop.permute.xlu0 %725
        %727 = vrot.lane.b32.xlu0 %v717, 3
        %v728 = vpop.permute.xlu0 %727
        %729 = vrot.lane.b32.xlu0 %v718, 3
        %v730 = vpop.permute.xlu0 %729
        %731 = vrot.lane.b32.xlu0 %v719, 3
        %v732 = vpop.permute.xlu0 %731
        %733 = vrot.lane.b32.xlu0 %v720, 3
        %v734 = vpop.permute.xlu0 %733
        %735 = vrot.lane.b32.xlu0 %v721, 3
        %v736 = vpop.permute.xlu0 %735
        %737 = vrot.lane.b32.xlu0 %v722, 3
        %v738 = vpop.permute.xlu0 %737
        %v739 = vmul.f32 %v707, %v724
        %v740 = vmul.f32 %v708, %v726
        %v741 = vmul.f32 %v709, %v728
        %v742 = vmul.f32 %v710, %v730
        %v743 = vmul.f32 %v711, %v732
        %v744 = vmul.f32 %v712, %v734
        %v745 = vmul.f32 %v713, %v736
        %v746 = vmul.f32 %v714, %v738
        %v747 = vadd.f32 %v739, %v740
        %v748 = vadd.f32 %v747, %v741
        %v749 = vadd.f32 %v748, %v742
        %v750 = vadd.f32 %v749, %v743
        %v751 = vadd.f32 %v750, %v744
        %v752 = vadd.f32 %v751, %v745
        %v753 = vadd.f32 %v752, %v746
        %s754 = sld [smem:[#allocation10 + $0x5]]
        %v755 = vstv %s754
        %v756 = vmul.f32 %v755, %v753
        %v757 = vadd.f32 %v706, %v756
        %s758 = sld [smem:[#allocation11 + $0x2]]
        %v759 = vstv %s758
        %v760 = vadd.f32 %v757, %v759
        %s761 = scalar_lea.vmem %s369, 144 [#allocation13]
        %762 = vst [vmem:[%s761] sm:$0xff] %v760
        %v763 = vld [vmem:[%s306] sm:$0xff]
        %v764 = vld [vmem:[%s306 + $0x8] sm:$0xff]
        %v765 = vld [vmem:[%s306 + $0x10] sm:$0xff]
        %v766 = vld [vmem:[%s306 + $0x18] sm:$0xff]
        %v767 = vld [vmem:[%s306 + $0x20] sm:$0xff]
        %v768 = vld [vmem:[%s306 + $0x28] sm:$0xff]
        %v769 = vld [vmem:[%s306 + $0x30] sm:$0xff]
        %v770 = vld [vmem:[%s306 + $0x38] sm:$0xff]
        %v771 = vld [vmem:[%s315] sm:$0xff]
        %v772 = vld [vmem:[%s315 + $0x8] sm:$0xff]
        %v773 = vld [vmem:[%s315 + $0x10] sm:$0xff]
        %v774 = vld [vmem:[%s315 + $0x18] sm:$0xff]
        %v775 = vld [vmem:[%s315 + $0x20] sm:$0xff]
        %v776 = vld [vmem:[%s315 + $0x28] sm:$0xff]
        %v777 = vld [vmem:[%s315 + $0x30] sm:$0xff]
        %v778 = vld [vmem:[%s315 + $0x38] sm:$0xff]
        %779 = vrot.lane.b32.xlu0 %v771, 4
        %v780 = vpop.permute.xlu0 %779
        %781 = vrot.lane.b32.xlu0 %v772, 4
        %v782 = vpop.permute.xlu0 %781
        %783 = vrot.lane.b32.xlu0 %v773, 4
        %v784 = vpop.permute.xlu0 %783
        %785 = vrot.lane.b32.xlu0 %v774, 4
        %v786 = vpop.permute.xlu0 %785
        %787 = vrot.lane.b32.xlu0 %v775, 4
        %v788 = vpop.permute.xlu0 %787
        %789 = vrot.lane.b32.xlu0 %v776, 4
        %v790 = vpop.permute.xlu0 %789
        %791 = vrot.lane.b32.xlu0 %v777, 4
        %v792 = vpop.permute.xlu0 %791
        %793 = vrot.lane.b32.xlu0 %v778, 4
        %v794 = vpop.permute.xlu0 %793
        %v795 = vmul.f32 %v763, %v780
        %v796 = vmul.f32 %v764, %v782
        %v797 = vmul.f32 %v765, %v784
        %v798 = vmul.f32 %v766, %v786
        %v799 = vmul.f32 %v767, %v788
        %v800 = vmul.f32 %v768, %v790
        %v801 = vmul.f32 %v769, %v792
        %v802 = vmul.f32 %v770, %v794
        %v803 = vadd.f32 %v795, %v796
        %v804 = vadd.f32 %v803, %v797
        %v805 = vadd.f32 %v804, %v798
        %v806 = vadd.f32 %v805, %v799
        %v807 = vadd.f32 %v806, %v800
        %v808 = vadd.f32 %v807, %v801
        %v809 = vadd.f32 %v808, %v802
        %s810 = sld [smem:[#allocation10 + $0x6]]
        %v811 = vstv %s810
        %v812 = vmul.f32 %v811, %v809
        %v813 = vld [vmem:[%s493] sm:$0xff]
        %v814 = vld [vmem:[%s493 + $0x8] sm:$0xff]
        %v815 = vld [vmem:[%s493 + $0x10] sm:$0xff]
        %v816 = vld [vmem:[%s493 + $0x18] sm:$0xff]
        %v817 = vld [vmem:[%s493 + $0x20] sm:$0xff]
        %v818 = vld [vmem:[%s493 + $0x28] sm:$0xff]
        %v819 = vld [vmem:[%s493 + $0x30] sm:$0xff]
        %v820 = vld [vmem:[%s493 + $0x38] sm:$0xff]
        %v821 = vld [vmem:[%s502] sm:$0xff]
        %v822 = vld [vmem:[%s502 + $0x8] sm:$0xff]
        %v823 = vld [vmem:[%s502 + $0x10] sm:$0xff]
        %v824 = vld [vmem:[%s502 + $0x18] sm:$0xff]
        %v825 = vld [vmem:[%s502 + $0x20] sm:$0xff]
        %v826 = vld [vmem:[%s502 + $0x28] sm:$0xff]
        %v827 = vld [vmem:[%s502 + $0x30] sm:$0xff]
        %v828 = vld [vmem:[%s502 + $0x38] sm:$0xff]
        %829 = vrot.lane.b32.xlu0 %v821, 4
        %v830 = vpop.permute.xlu0 %829
        %831 = vrot.lane.b32.xlu0 %v822, 4
        %v832 = vpop.permute.xlu0 %831
        %833 = vrot.lane.b32.xlu0 %v823, 4
        %v834 = vpop.permute.xlu0 %833
        %835 = vrot.lane.b32.xlu0 %v824, 4
        %v836 = vpop.permute.xlu0 %835
        %837 = vrot.lane.b32.xlu0 %v825, 4
        %v838 = vpop.permute.xlu0 %837
        %839 = vrot.lane.b32.xlu0 %v826, 4
        %v840 = vpop.permute.xlu0 %839
        %841 = vrot.lane.b32.xlu0 %v827, 4
        %v842 = vpop.permute.xlu0 %841
        %843 = vrot.lane.b32.xlu0 %v828, 4
        %v844 = vpop.permute.xlu0 %843
        %v845 = vmul.f32 %v813, %v830
        %v846 = vmul.f32 %v814, %v832
        %v847 = vmul.f32 %v815, %v834
        %v848 = vmul.f32 %v816, %v836
        %v849 = vmul.f32 %v817, %v838
        %v850 = vmul.f32 %v818, %v840
        %v851 = vmul.f32 %v819, %v842
        %v852 = vmul.f32 %v820, %v844
        %v853 = vadd.f32 %v845, %v846
        %v854 = vadd.f32 %v853, %v847
        %v855 = vadd.f32 %v854, %v848
        %v856 = vadd.f32 %v855, %v849
        %v857 = vadd.f32 %v856, %v850
        %v858 = vadd.f32 %v857, %v851
        %v859 = vadd.f32 %v858, %v852
        %s860 = sld [smem:[#allocation10 + $0x7]]
        %v861 = vstv %s860
        %v862 = vmul.f32 %v861, %v859
        %v863 = vadd.f32 %v812, %v862
        %s864 = sld [smem:[#allocation11 + $0x3]]
        %v865 = vstv %s864
        %v866 = vadd.f32 %v863, %v865
        %s867 = scalar_lea.vmem %s369, 152 [#allocation13]
        %868 = vst [vmem:[%s867] sm:$0xff] %v866
        %s869 = smul.u32 1, 16
        %s870 = smul.u32 %s869, 8
        %s871 = smul.u32 %s870, 1
        %s872 = sshll.u32 %s871, 4
        %873 = dma.done [#allocation2], %s872
        %s874 = sand.u32 %s175, 1
        %s875 = scalar_lea.sflag [#allocation5], %s874
        %s876 = sand.u32 %s175, 1
        %s877 = smul.addr %s876, 160
        %s878 = scalar_lea.vmem [#allocation13], %s877
        // Predicated region
        $region95: #{tpu_custom_call.1} parent=39 // pred_check
          %p879 = pneg %p185
        $region96: #{tpu_custom_call.1} parent=39 // pred_check_branch
          %881 = sbr.rel (%p879) target = $region98
        $region97: #{tpu_custom_call.1} parent=39 // pred_region
          %s883 = ssub.s32 2560, 2560
          %884 = vsyncadd %s875, %s883
          %s885 = smul.addr %s31, 40
          %s886 = sadd.s32 %s32, %s885
          %s887 = smul.addr %s886, 128
          %s888 = scalar_lea.hbm %s5, %s887
          %s889 = sshll.u32 %s878, 4
          %s890 = int_to_ptr.vmem [resolvable:$true] %s889
          %895 = dma.vmem_to_hbm [thread:$0]  %s890, 2560, %s888, %s875, 128, 256, 8
        $region98: #{tpu_custom_call.1} parent=39 // pred_fallthru
          _
      $region40: #{tpu_custom_call.1} parent=5 // pred_fallthru
        _
      %p896 = scmp.le.s32.totalorder 2, %s22
      // Predicated region
      $region99: #{tpu_custom_call.1} parent=5 // pred_check
        %p897 = pneg %p896
      $region100: #{tpu_custom_call.1} parent=5 // pred_check_branch
        %899 = sbr.rel (%p897) target = $region102
      $region101: #{tpu_custom_call.1} parent=5 // pred_region
        %s900 = ssub.s32 %s22, 2
        // Predicated region
        $region103: #{tpu_custom_call.1} parent=101 // pred_check
          %p901 = pneg %p191
        $region104: #{tpu_custom_call.1} parent=101 // pred_check_branch
          %903 = sbr.rel (%p901) target = $region106
        $region105: #{tpu_custom_call.1} parent=101 // pred_region
          %s904 = sand.u32 %s176, 1
          %s905 = scalar_lea.sflag [#allocation5], %s904
          %s906 = sand.u32 %s176, 1
          %s907 = smul.addr %s906, 160
          %s908 = scalar_lea.vmem [#allocation13], %s907
          %909 = dma.done %s905, 2560
        $region106: #{tpu_custom_call.1} parent=101 // pred_fallthru
          _
      $region102: #{tpu_custom_call.1} parent=5 // pred_fallthru
        _
    $region6: #{tpu_custom_call.1} parent=1 // loop_footer
      %s26 = sadd.s32 1, %s22
    $region7: #{tpu_custom_call.1} parent=1 // loop_footer_branch
      %21 = sbr.rel target = $region3
    $region8: #{tpu_custom_call.1} parent=1 // loop_exit
      _
    %910 = vsyncpa [#allocation4], 1
    %s911 = scalar_lea.sflag [#allocation4], 1
    %912 = vsyncpa %s911, 1
    %913 = vsyncpa [#allocation8], 1
    %s914 = scalar_lea.sflag [#allocation8], 1
    %915 = vsyncpa %s914, 1
    %916 = vsyncpa [#allocation5], 1
    %s917 = scalar_lea.sflag [#allocation5], 1
    %918 = vsyncpa %s917, 1
    %919 = vsyncpa [#allocation6], 1
    %s920 = scalar_lea.sflag [#allocation6], 1
    %921 = vsyncpa %s920, 1
    %922 = vsyncpa [#allocation12], 1
  %923 = vsyncmov [#allocation2]
  %s924 = vpop.sfrf %923
  %p925 = scmp.eq.s32.totalorder %s924, 0
  %p926 = pneg %p925
  %928 = shalt.err (%p926)

</llo_original>
